<compile_context>
chip_gen: v6e
topology: v6e:2x2x1
jax: 0.10.0
libtpu: 0.0.40
codegen_flags: <defaults>
</compile_context>

<pallas_src>
import functools

import jax
import jax.numpy as jnp
from jax.experimental import pallas as pl
from jax.experimental.pallas import tpu as pltpu

MARGIN = 1.0
EPS = 1e-9

_TARGET_BLOCK_BYTES = 4 * 1024 * 1024   # ~4 MiB per (TILE_B, D) input block
_MAX_TILE_B = 2048
_VMEM_LIMIT_BYTES = 48 * 1024 * 1024    # headroom on v7x (64 MiB phys), fine on v5e/v6e


def _contrastive_kernel(o1_ref, o2_ref, t_ref, out_ref, *, margin, eps,
                        size_average, batch, tile_b):
    i = pl.program_id(0)

    @pl.when(i == 0)
    def _():
        out_ref[0, 0] = jnp.float32(0.0)

    # Cast to f32 after the load (free on the VPU); keeps HBM traffic narrow.
    o1 = o1_ref[...].astype(jnp.float32)                       # (TILE_B, D)
    o2 = o2_ref[...].astype(jnp.float32)                       # (TILE_B, D)
    diff = o2 - o1
    distances = jnp.sum(diff * diff, axis=1, keepdims=True)    # (TILE_B, 1)

    target = t_ref[...].astype(jnp.float32)                    # (TILE_B, 1)
    # F.relu(margin - sqrt(distances + eps)) ** 2
    hinge = jnp.maximum(margin - jnp.sqrt(distances + eps), 0.0)
    losses = 0.5 * (target * distances + (1.0 - target) * hinge * hinge)

    # Mask rows of the last (partial) tile that lie beyond the true batch.
    row = jax.lax.broadcasted_iota(jnp.int32, losses.shape, 0) + i * tile_b
    losses = jnp.where(row < batch, losses, 0.0)

    out_ref[0, 0] += jnp.sum(losses)

    @pl.when(i == pl.num_programs(0) - 1)
    def _():
        if size_average:
            out_ref[0, 0] = out_ref[0, 0] / jnp.float32(batch)


def _pick_tile_b(batch, dim, itemsize):
    rows = _TARGET_BLOCK_BYTES // max(1, dim * itemsize)
    rows = max(8, min(_MAX_TILE_B, rows))
    rows = (rows // 8) * 8                    # (8, 128) sublane constraint
    return batch if batch <= rows else rows


def contrastive_loss(output1, output2, target, *, margin=MARGIN, eps=EPS,
                     size_average=True, tile_b=None):
    """output1, output2: (B, D) float; target: (B,) 0/1. Returns f32 scalar."""
    B, D = output1.shape
    itemsize = jnp.dtype(output1.dtype).itemsize
    if tile_b is None:
        tile_b = _pick_tile_b(B, D, itemsize)
    num_tiles = -(-B // tile_b)

    t2d = target.reshape(B, 1).astype(jnp.int32)

    kernel = functools.partial(
        _contrastive_kernel, margin=margin, eps=eps,
        size_average=size_average, batch=B, tile_b=tile_b)

    cost = pl.CostEstimate(
        flops=3 * B * D + 8 * B,
        transcendentals=B,
        bytes_accessed=2 * B * D * itemsize + B * 4 + 4)

    # TODO(synk): for D < 128 a lane-dense (D, B) layout would speed up the
    # per-row sqrt/hinge math; skipped since the kernel is HBM-bound for real D.
    out = pl.pallas_call(
        kernel,
        out_shape=jax.ShapeDtypeStruct((1, 1), jnp.float32),
        grid_spec=pltpu.PrefetchScalarGridSpec(
            num_scalar_prefetch=0,
            grid=(num_tiles,),
            in_specs=[
                pl.BlockSpec((tile_b, D), lambda i: (i, 0)),
                pl.BlockSpec((tile_b, D), lambda i: (i, 0)),
                pl.BlockSpec((tile_b, 1), lambda i: (i, 0)),
            ],
            out_specs=pl.BlockSpec((1, 1), lambda i: (0, 0),
                                   memory_space=pltpu.SMEM),
        ),
        compiler_params=pltpu.CompilerParams(
            dimension_semantics=("arbitrary",),
            vmem_limit_bytes=_VMEM_LIMIT_BYTES),
        cost_estimate=cost,
    )(output1, output2, t2d)
    return out[0, 0]


def contrastive_loss_ref(output1, output2, target, *, margin=MARGIN, eps=EPS,
                         size_average=True):
    """Pure-JAX reference mirroring the PyTorch forward."""
    distances = jnp.sum((output2 - output1) ** 2, axis=1)
    t = target.astype(jnp.float32)
    hinge = jnp.maximum(margin - jnp.sqrt(distances + eps), 0.0)
    losses = 0.5 * (t * distances + (1.0 - t) * hinge ** 2)
    return jnp.mean(losses) if size_average else jnp.sum(losses)


if __name__ == "__main__":
    key = jax.random.PRNGKey(0)
    k1, k2, k3 = jax.random.split(key, 3)

    B, D = 50, 32   # B deliberately not a multiple of the forced tile below
    output1 = jax.random.normal(k1, (B, D), dtype=jnp.float32)
    output2 = jax.random.normal(k2, (B, D), dtype=jnp.float32)
    target = jax.random.bernoulli(k3, 0.5, (B,)).astype(jnp.int32)

    # 1) Forced small tile: exercises the grid, accumulator, and edge masking.
    loss = contrastive_loss(output1, output2, target, tile_b=16)
    jax.block_until_ready(loss)
    ref = contrastive_loss_ref(output1, output2, target)
    assert jnp.allclose(loss, ref, rtol=1e-5, atol=1e-6), (loss, ref)

    # 2) Auto tile, size_average=False (sum reduction).
    loss_sum = contrastive_loss(output1, output2, target, size_average=False)
    jax.block_until_ready(loss_sum)
    ref_sum = contrastive_loss_ref(output1, output2, target, size_average=False)
    assert jnp.allclose(loss_sum, ref_sum, rtol=1e-5, atol=1e-5), (loss_sum, ref_sum)

    # 3) bf16 inputs stay bf16 through HBM; cast happens inside the kernel.
    o1b = output1.astype(jnp.bfloat16)
    o2b = output2.astype(jnp.bfloat16)
    loss_bf16 = contrastive_loss(o1b, o2b, target, tile_b=16)
    jax.block_until_ready(loss_bf16)
    ref_bf16 = contrastive_loss_ref(o1b.astype(jnp.float32),
                                    o2b.astype(jnp.float32), target)
    assert jnp.allclose(loss_bf16, ref_bf16, rtol=1e-2, atol=1e-3), (loss_bf16, ref_bf16)

    print("KERNEL_OK")
</pallas_src>

<mosaic_0001>
module attributes {stable_mosaic.version = 11 : i64} {
  func.func @_contrastive_kernel(%arg0: i32, %arg1: memref<16x32xf32, #tpu.memory_space<vmem>>, %arg2: memref<16x32xf32, #tpu.memory_space<vmem>>, %arg3: memref<16x1xi32, #tpu.memory_space<vmem>>, %arg4: memref<1x1xf32, #tpu.memory_space<smem>>) attributes {dimension_semantics = [#tpu.dimension_semantics<arbitrary>], iteration_bounds = array<i64: 4>, scalar_prefetch = 0 : i64, scratch_operands = 0 : i64, tpu.core_type = #tpu.core_type<tc>, window_params = [{transform_indices = @transform_0, window_bounds = array<i64: 16, 32>}, {transform_indices = @transform_1, window_bounds = array<i64: 16, 32>}, {transform_indices = @transform_2, window_bounds = array<i64: 16, 1>}, {transform_indices = @transform_3, window_bounds = array<i64: 1, 1>}]} {
    %c0_i32 = arith.constant 0 : i32
    %0 = arith.cmpi eq, %arg0, %c0_i32 : i32
    %1 = arith.extui %0 : i1 to i32
    %c0_i32_0 = arith.constant 0 : i32
    %2 = arith.cmpi ne, %1, %c0_i32_0 : i32
    scf.if %2 {
      %cst_18 = arith.constant 0.000000e+00 : f32
      %c0_19 = arith.constant 0 : index
      %c0_20 = arith.constant 0 : index
      %44 = memref.load %arg4[%c0_19, %c0_20] : memref<1x1xf32, #tpu.memory_space<smem>>
      memref.store %cst_18, %arg4[%c0_19, %c0_20] : memref<1x1xf32, #tpu.memory_space<smem>>
    } else {
    }
    %c0 = arith.constant 0 : index
    %c0_1 = arith.constant 0 : index
    %3 = vector.load %arg1[%c0, %c0_1] : memref<16x32xf32, #tpu.memory_space<vmem>>, vector<16x32xf32>
    %c0_2 = arith.constant 0 : index
    %c0_3 = arith.constant 0 : index
    %4 = vector.load %arg2[%c0_2, %c0_3] : memref<16x32xf32, #tpu.memory_space<vmem>>, vector<16x32xf32>
    %5 = arith.subf %4, %3 : vector<16x32xf32>
    %6 = arith.mulf %5, %5 : vector<16x32xf32>
    %cst = arith.constant dense<0.000000e+00> : vector<16xf32>
    %7 = vector.multi_reduction <add>, %6, %cst [1] : vector<16x32xf32> to vector<16xf32>
    %8 = vector.shape_cast %7 : vector<16xf32> to vector<16x1xf32>
    %c0_4 = arith.constant 0 : index
    %c0_5 = arith.constant 0 : index
    %9 = vector.load %arg3[%c0_4, %c0_5] : memref<16x1xi32, #tpu.memory_space<vmem>>, vector<16x1xi32>
    %10 = arith.sitofp %9 : vector<16x1xi32> to vector<16x1xf32>
    %cst_6 = arith.constant 9.99999971E-10 : f32
    %11 = vector.broadcast %cst_6 : f32 to vector<16x1xf32>
    %12 = arith.addf %8, %11 : vector<16x1xf32>
    %13 = math.sqrt %12 : vector<16x1xf32>
    %cst_7 = arith.constant 1.000000e+00 : f32
    %14 = vector.broadcast %cst_7 : f32 to vector<16x1xf32>
    %15 = arith.subf %14, %13 : vector<16x1xf32>
    %cst_8 = arith.constant 0.000000e+00 : f32
    %16 = vector.broadcast %cst_8 : f32 to vector<16x1xf32>
    %17 = arith.maximumf %15, %16 : vector<16x1xf32>
    %18 = arith.mulf %10, %8 : vector<16x1xf32>
    %cst_9 = arith.constant 1.000000e+00 : f32
    %19 = vector.broadcast %cst_9 : f32 to vector<16x1xf32>
    %20 = arith.subf %19, %10 : vector<16x1xf32>
    %21 = arith.mulf %20, %17 : vector<16x1xf32>
    %22 = arith.mulf %21, %17 : vector<16x1xf32>
    %23 = arith.addf %18, %22 : vector<16x1xf32>
    %cst_10 = arith.constant 5.000000e-01 : f32
    %24 = vector.broadcast %cst_10 : f32 to vector<16x1xf32>
    %25 = arith.mulf %24, %23 : vector<16x1xf32>
    %26 = tpu.iota {dimensions = array<i32: 0>} : vector<16x1xi32>
    %c16_i32 = arith.constant 16 : i32
    %27 = arith.muli %arg0, %c16_i32 : i32
    %28 = vector.broadcast %27 : i32 to vector<16x1xi32>
    %29 = arith.addi %26, %28 : vector<16x1xi32>
    %c50_i32 = arith.constant 50 : i32
    %30 = vector.broadcast %c50_i32 : i32 to vector<16x1xi32>
    %31 = arith.cmpi slt, %29, %30 : vector<16x1xi32>
    %cst_11 = arith.constant 0.000000e+00 : f32
    %32 = vector.broadcast %cst_11 : f32 to vector<16x1xf32>
    %33 = arith.select %31, %25, %32 : vector<16x1xi1>, vector<16x1xf32>
    %c0_12 = arith.constant 0 : index
    %c0_13 = arith.constant 0 : index
    %34 = memref.load %arg4[%c0_12, %c0_13] : memref<1x1xf32, #tpu.memory_space<smem>>
    %35 = vector.shape_cast %33 : vector<16x1xf32> to vector<1x16x1xf32>
    %cst_14 = arith.constant dense<0.000000e+00> : vector<1xf32>
    %36 = vector.multi_reduction <add>, %35, %cst_14 [1, 2] : vector<1x16x1xf32> to vector<1xf32>
    %37 = vector.shape_cast %36 : vector<1xf32> to vector<1x1x1xf32>
    %38 = vector.extract %37[0, 0, 0] : f32 from vector<1x1x1xf32>
    %39 = arith.addf %34, %38 : f32
    %c0_15 = arith.constant 0 : index
    %c0_16 = arith.constant 0 : index
    %40 = memref.load %arg4[%c0_15, %c0_16] : memref<1x1xf32, #tpu.memory_space<smem>>
    memref.store %39, %arg4[%c0_15, %c0_16] : memref<1x1xf32, #tpu.memory_space<smem>>
    %c3_i32 = arith.constant 3 : i32
    %41 = arith.cmpi eq, %arg0, %c3_i32 : i32
    %42 = arith.extui %41 : i1 to i32
    %c0_i32_17 = arith.constant 0 : i32
    %43 = arith.cmpi ne, %42, %c0_i32_17 : i32
    scf.if %43 {
      %c0_18 = arith.constant 0 : index
      %c0_19 = arith.constant 0 : index
      %44 = memref.load %arg4[%c0_18, %c0_19] : memref<1x1xf32, #tpu.memory_space<smem>>
      %cst_20 = arith.constant 5.000000e+01 : f32
      %45 = arith.divf %44, %cst_20 : f32
      %c0_21 = arith.constant 0 : index
      %c0_22 = arith.constant 0 : index
      %46 = memref.load %arg4[%c0_21, %c0_22] : memref<1x1xf32, #tpu.memory_space<smem>>
      memref.store %45, %arg4[%c0_21, %c0_22] : memref<1x1xf32, #tpu.memory_space<smem>>
    } else {
    }
    return
  }
  func.func @transform_0(%arg0: i32) -> (i32, i32) {
    %c0_i32 = arith.constant 0 : i32
    %c0_i32_0 = arith.constant 0 : i32
    return %arg0, %c0_i32 : i32, i32
  }
  func.func @transform_1(%arg0: i32) -> (i32, i32) {
    %c0_i32 = arith.constant 0 : i32
    %c0_i32_0 = arith.constant 0 : i32
    return %arg0, %c0_i32 : i32, i32
  }
  func.func @transform_2(%arg0: i32) -> (i32, i32) {
    %c0_i32 = arith.constant 0 : i32
    %c0_i32_0 = arith.constant 0 : i32
    return %arg0, %c0_i32 : i32, i32
  }
  func.func @transform_3(%arg0: i32) -> (i32, i32) {
    %c0_i32 = arith.constant 0 : i32
    %c0_i32_0 = arith.constant 0 : i32
    %c0_i32_1 = arith.constant 0 : i32
    return %c0_i32, %c0_i32_0 : i32, i32
  }
}

</mosaic_0001>

<llo_original>
// kernel: tpu_custom_call.1
$region0: #{tpu_custom_call.1}
  #allocation0 [shape = 'u32[]', space=smem, size = 0x4, offset = 0x4, fixed_abs, tag = 'smem constant byte address 0x4 - core index']
  #allocation1 [shape = 'u32[144,128]{1,0:T(1,128)}', space=vmem, size = 0x12000, scoped, tag = 'internal scratch']
  %s0 = inlined_call_operand.vmem [shape: f32[50,32], index: 0, kind: input, shape index: {}]
  %s1 = inlined_call_operand.vmem [shape: f32[50,32], index: 1, kind: input, shape index: {}]
  %s2 = inlined_call_operand.vmem [shape: s32[50,1], index: 2, kind: input, shape index: {}]
  %s3 = inlined_call_operand.hbm [shape: f32[1,1], index: 3, kind: output, shape index: {}]
  %s4 = sld [smem:[#allocation0]]
  $region53: #{tpu_custom_call.1} parent=0
    _
  %s6 = ssub.s32 1, %s4
  %s7 = scalar_select 0, %s6, %s4
  $region1: #{tpu_custom_call.1} parent=0
    #allocation2 [shape = 'u8[512]{0}', space=smem, size = 0x200, scoped, tag = 'output window, operand 0, single buffered']
    #allocation3 [shape = 's32[2]{0}', space=sflag, size = 0x8, scoped, tag = 'scoped memory for tpu_custom_call.1']
    %8 = vsyncpa [#allocation3], 0
    loop: start=0, step=1, limit=6
    $region2: #{tpu_custom_call.1} parent=1 // loop_pre_header
      _
    $region3: #{tpu_custom_call.1} parent=1 // loop_header
      %s10 = sphi 0, %s14
      %p11 = scmp.ge.s32.totalorder %s10, 6
      %s20 = sphi 0, %s22
      %s23 = sphi 0, %s20
      %s24 = sphi 0, %s23
      %s40 = sphi 0, %s24
      %s46 = sphi 0, %s48
      %s49 = sphi 0, %s46
      %s50 = sphi 0, %s49
      %s66 = sphi 0, %s50
      %s72 = sphi 0, %s74
      %s75 = sphi 0, %s72
      %s76 = sphi 0, %s75
      %s92 = sphi 0, %s76
      %s96 = sphi 0, %s96
      %s98 = sphi 0, %s96
      %s99 = sphi 0, %s98
      %s113 = sphi 0, %s99
    $region4: #{tpu_custom_call.1} parent=1 // loop_header_branch
      %13 = sbr.rel (%p11) target = $region8
    $region5: #{tpu_custom_call.1} parent=1 // loop_body
      %s15 = ssub.s32 %s10, 1
      %s16 = ssub.s32 %s10, 2
      %s17 = sadd.s32 %s10, 1
      %s18 = ssub.s32 %s10, %s17
      %p19 = scmp.eq.s32.totalorder %s18, 0
      %s21 = sadd.s32 %s20, 1
      %s22 = scalar_select %p19, %s20, %s21
      %p25 = pneg %p19
      %p26 = scmp.eq.s32.totalorder %s10, 3
      %p27 = por %p25, %p26
      %p28 = scmp.ne.s32.totalorder %s20, %s23
      %p29 = scmp.eq.s32.totalorder %s10, 0
      %p30 = por %p28, %p29
      %p31 = scmp.ne.s32.totalorder %s20, %s23
      %p32 = scmp.eq.s32.totalorder %s15, 3
      %p33 = por %p31, %p32
      %p34 = scmp.ne.s32.totalorder %s23, %s24
      %p35 = scmp.eq.s32.totalorder %s15, 0
      %p36 = por %p34, %p35
      %p37 = scmp.ne.s32.totalorder %s23, %s24
      %p38 = scmp.eq.s32.totalorder %s16, 3
      %p39 = por %p37, %p38
      %p41 = scmp.ne.s32.totalorder %s24, %s40
      %p42 = scmp.eq.s32.totalorder %s16, 0
      %p43 = por %p41, %p42
      %s44 = ssub.s32 %s10, %s17
      %p45 = scmp.eq.s32.totalorder %s44, 0
      %s47 = sadd.s32 %s46, 1
      %s48 = scalar_select %p45, %s46, %s47
      %p51 = pneg %p45
      %p52 = scmp.eq.s32.totalorder %s10, 3
      %p53 = por %p51, %p52
      %p54 = scmp.ne.s32.totalorder %s46, %s49
      %p55 = scmp.eq.s32.totalorder %s10, 0
      %p56 = por %p54, %p55
      %p57 = scmp.ne.s32.totalorder %s46, %s49
      %p58 = scmp.eq.s32.totalorder %s15, 3
      %p59 = por %p57, %p58
      %p60 = scmp.ne.s32.totalorder %s49, %s50
      %p61 = scmp.eq.s32.totalorder %s15, 0
      %p62 = por %p60, %p61
      %p63 = scmp.ne.s32.totalorder %s49, %s50
      %p64 = scmp.eq.s32.totalorder %s16, 3
      %p65 = por %p63, %p64
      %p67 = scmp.ne.s32.totalorder %s50, %s66
      %p68 = scmp.eq.s32.totalorder %s16, 0
      %p69 = por %p67, %p68
      %s70 = ssub.s32 %s10, %s17
      %p71 = scmp.eq.s32.totalorder %s70, 0
      %s73 = sadd.s32 %s72, 1
      %s74 = scalar_select %p71, %s72, %s73
      %p77 = pneg %p71
      %p78 = scmp.eq.s32.totalorder %s10, 3
      %p79 = por %p77, %p78
      %p80 = scmp.ne.s32.totalorder %s72, %s75
      %p81 = scmp.eq.s32.totalorder %s10, 0
      %p82 = por %p80, %p81
      %p83 = scmp.ne.s32.totalorder %s72, %s75
      %p84 = scmp.eq.s32.totalorder %s15, 3
      %p85 = por %p83, %p84
      %p86 = scmp.ne.s32.totalorder %s75, %s76
      %p87 = scmp.eq.s32.totalorder %s15, 0
      %p88 = por %p86, %p87
      %p89 = scmp.ne.s32.totalorder %s75, %s76
      %p90 = scmp.eq.s32.totalorder %s16, 3
      %p91 = por %p89, %p90
      %p93 = scmp.ne.s32.totalorder %s76, %s92
      %p94 = scmp.eq.s32.totalorder %s16, 0
      %p95 = por %p93, %p94
      %s97 = sadd.s32 %s96, 1
      %p100 = scmp.eq.s32.totalorder %s10, 3
      %p101 = scmp.ne.s32.totalorder %s96, %s98
      %p102 = scmp.eq.s32.totalorder %s10, 0
      %p103 = por %p101, %p102
      %p104 = scmp.ne.s32.totalorder %s96, %s98
      %p105 = scmp.eq.s32.totalorder %s15, 3
      %p106 = por %p104, %p105
      %p107 = scmp.ne.s32.totalorder %s98, %s99
      %p108 = scmp.eq.s32.totalorder %s15, 0
      %p109 = por %p107, %p108
      %p110 = scmp.ne.s32.totalorder %s98, %s99
      %p111 = scmp.eq.s32.totalorder %s16, 3
      %p112 = por %p110, %p111
      %p114 = scmp.ne.s32.totalorder %s99, %s113
      %p115 = scmp.eq.s32.totalorder %s16, 0
      %p116 = por %p114, %p115
      %p117 = scmp.le.s32.totalorder 1, %s10
      %p118 = scmp.lt.s32.totalorder %s10, 5
      %p119 = pnand %p117, %p118
      %p120 = pneg %p119
      // Predicated region
      $region9: #{tpu_custom_call.1} parent=5 // pred_check
        _
      $region10: #{tpu_custom_call.1} parent=5 // pred_check_branch
        %122 = sbr.rel (%p119) target = $region12
      $region11: #{tpu_custom_call.1} parent=5 // pred_region
        %s123 = ssub.s32 %s10, 1
      $region12: #{tpu_custom_call.1} parent=5 // pred_fallthru
        _
      %p124 = scmp.lt.s32.totalorder %s10, 4
      // Predicated region
      $region13: #{tpu_custom_call.1} parent=5 // pred_check
        %p125 = pneg %p124
      $region14: #{tpu_custom_call.1} parent=5 // pred_check_branch
        %127 = sbr.rel (%p125) target = $region16
      $region15: #{tpu_custom_call.1} parent=5 // pred_region
        // Predicated region
        $region17: #{tpu_custom_call.1} parent=15 // pred_check
          %p128 = pneg %p30
        $region18: #{tpu_custom_call.1} parent=15 // pred_check_branch
          %130 = sbr.rel (%p128) target = $region20
        $region19: #{tpu_custom_call.1} parent=15 // pred_region
          %s131 = smul.u32 2, %s10
          %s132 = ssub.s32 7, %s131
          %p133 = scmp.lt.s32.totalorder %s132, 2
          %s134 = scalar_select %p133, %s132, 2
          %s135 = smul.u32 128, %s134
          %p136 = scmp.lt.s32.totalorder %s131, 6
          %s137 = scalar_select %p136, %s131, 6
          %s138 = smul.addr %s137, 8
          %s139 = scalar_lea.vmem %s0, %s138
          %s140 = smul.u32 2, %s10
          %s141 = ssub.s32 7, %s140
          %p142 = scmp.lt.s32.totalorder %s141, 2
          %s143 = scalar_select %p142, %s141, 2
          %s144 = smul.u32 128, %s143
        $region20: #{tpu_custom_call.1} parent=15 // pred_fallthru
          _
        // Predicated region
        $region21: #{tpu_custom_call.1} parent=15 // pred_check
          %p145 = pneg %p56
        $region22: #{tpu_custom_call.1} parent=15 // pred_check_branch
          %147 = sbr.rel (%p145) target = $region24
        $region23: #{tpu_custom_call.1} parent=15 // pred_region
          %s148 = smul.u32 2, %s10
          %s149 = ssub.s32 7, %s148
          %p150 = scmp.lt.s32.totalorder %s149, 2
          %s151 = scalar_select %p150, %s149, 2
          %s152 = smul.u32 128, %s151
          %p153 = scmp.lt.s32.totalorder %s148, 6
          %s154 = scalar_select %p153, %s148, 6
          %s155 = smul.addr %s154, 8
          %s156 = scalar_lea.vmem %s1, %s155
          %s157 = smul.u32 2, %s10
          %s158 = ssub.s32 7, %s157
          %p159 = scmp.lt.s32.totalorder %s158, 2
          %s160 = scalar_select %p159, %s158, 2
          %s161 = smul.u32 128, %s160
        $region24: #{tpu_custom_call.1} parent=15 // pred_fallthru
          _
        // Predicated region
        $region25: #{tpu_custom_call.1} parent=15 // pred_check
          %p162 = pneg %p82
        $region26: #{tpu_custom_call.1} parent=15 // pred_check_branch
          %164 = sbr.rel (%p162) target = $region28
        $region27: #{tpu_custom_call.1} parent=15 // pred_region
          %s165 = smul.u32 2, %s10
          %s166 = ssub.s32 7, %s165
          %p167 = scmp.lt.s32.totalorder %s166, 2
          %s168 = scalar_select %p167, %s166, 2
          %s169 = smul.u32 128, %s168
          %p170 = scmp.lt.s32.totalorder %s165, 6
          %s171 = scalar_select %p170, %s165, 6
          %s172 = smul.addr %s171, 8
          %s173 = scalar_lea.vmem %s2, %s172
          %s174 = smul.u32 2, %s10
          %s175 = ssub.s32 7, %s174
          %p176 = scmp.lt.s32.totalorder %s175, 2
          %s177 = scalar_select %p176, %s175, 2
          %s178 = smul.u32 128, %s177
        $region28: #{tpu_custom_call.1} parent=15 // pred_fallthru
          _
      $region16: #{tpu_custom_call.1} parent=5 // pred_fallthru
        _
      %p179 = scmp.le.s32.totalorder 1, %s10
      %p180 = scmp.lt.s32.totalorder %s10, 5
      %p181 = pnand %p179, %p180
      %p182 = pneg %p181
      // Predicated region
      $region29: #{tpu_custom_call.1} parent=5 // pred_check
        _
      $region30: #{tpu_custom_call.1} parent=5 // pred_check_branch
        %184 = sbr.rel (%p181) target = $region32
      $region31: #{tpu_custom_call.1} parent=5 // pred_region
        %s185 = ssub.s32 %s10, 1
        %s186 = smul.u32 2, %s15
        %s187 = ssub.s32 7, %s186
        %p188 = scmp.lt.s32.totalorder %s187, 2
        %s189 = scalar_select %p188, %s187, 2
        %s190 = smul.u32 128, %s189
        %p191 = scmp.lt.s32.totalorder %s186, 6
        %s192 = scalar_select %p191, %s186, 6
        %s193 = smul.addr %s192, 8
        %s194 = scalar_lea.vmem %s0, %s193
        %p195 = pneg %p36
        %p196 = pneg %p33
        %s197 = smul.u32 2, %s15
        %s198 = ssub.s32 7, %s197
        %p199 = scmp.lt.s32.totalorder %s198, 2
        %s200 = scalar_select %p199, %s198, 2
        %s201 = smul.u32 128, %s200
        %p202 = scmp.lt.s32.totalorder %s197, 6
        %s203 = scalar_select %p202, %s197, 6
        %s204 = smul.addr %s203, 8
        %s205 = scalar_lea.vmem %s1, %s204
        %p206 = pneg %p62
        %p207 = pneg %p59
        %s208 = smul.u32 2, %s15
        %s209 = ssub.s32 7, %s208
        %p210 = scmp.lt.s32.totalorder %s209, 2
        %s211 = scalar_select %p210, %s209, 2
        %s212 = smul.u32 128, %s211
        %p213 = scmp.lt.s32.totalorder %s208, 6
        %s214 = scalar_select %p213, %s208, 6
        %s215 = smul.addr %s214, 8
        %s216 = scalar_lea.vmem %s2, %s215
        %p217 = pneg %p88
        %p218 = pneg %p85
        %p219 = pneg %p109
        %p220 = pneg %p106
        %s221 = smul.u32 2, %s15
        %s222 = ssub.s32 7, %s221
        %p223 = scmp.lt.s32.totalorder %s222, 2
        %s224 = scalar_select %p223, %s222, 2
        %s225 = smul.u32 128, %s224
        %p226 = scmp.lt.s32.totalorder %s221, 6
        %s227 = scalar_select %p226, %s221, 6
        %s228 = smul.addr %s227, 8
        %s229 = scalar_lea.vmem %s0, %s228
        %s230 = smul.u32 2, %s15
        %s231 = ssub.s32 7, %s230
        %p232 = scmp.lt.s32.totalorder %s231, 2
        %s233 = scalar_select %p232, %s231, 2
        %s234 = smul.u32 128, %s233
        %s235 = smul.u32 2, %s15
        %s236 = ssub.s32 7, %s235
        %p237 = scmp.lt.s32.totalorder %s236, 2
        %s238 = scalar_select %p237, %s236, 2
        %s239 = smul.u32 128, %s238
        %p240 = scmp.lt.s32.totalorder %s235, 6
        %s241 = scalar_select %p240, %s235, 6
        %s242 = smul.addr %s241, 8
        %s243 = scalar_lea.vmem %s1, %s242
        %s244 = smul.u32 2, %s15
        %s245 = ssub.s32 7, %s244
        %p246 = scmp.lt.s32.totalorder %s245, 2
        %s247 = scalar_select %p246, %s245, 2
        %s248 = smul.u32 128, %s247
        %s249 = smul.u32 2, %s15
        %s250 = ssub.s32 7, %s249
        %p251 = scmp.lt.s32.totalorder %s250, 2
        %s252 = scalar_select %p251, %s250, 2
        %s253 = smul.u32 128, %s252
        %p254 = scmp.lt.s32.totalorder %s249, 6
        %s255 = scalar_select %p254, %s249, 6
        %s256 = smul.addr %s255, 8
        %s257 = scalar_lea.vmem %s2, %s256
        %s258 = smul.u32 2, %s15
        %s259 = ssub.s32 7, %s258
        %p260 = scmp.lt.s32.totalorder %s259, 2
        %s261 = scalar_select %p260, %s259, 2
        %s262 = smul.u32 128, %s261
        %p263 = scmp.eq.s32.totalorder %s15, 0
        // Predicated region
        $region33: #{tpu_custom_call.1} parent=31 // pred_check
          %p264 = pneg %p263
        $region34: #{tpu_custom_call.1} parent=31 // pred_check_branch
          %266 = sbr.rel (%p264) target = $region36
        $region35: #{tpu_custom_call.1} parent=31 // pred_region
          %s267 = scalar_lea.smem [#allocation2], 0
          %268 = sst [smem:[%s267]] 0.0
        $region36: #{tpu_custom_call.1} parent=31 // pred_fallthru
          _
        %v269 = vld [vmem:[%s229] sm:$0xff]
        %v270 = vld [vmem:[%s229 + $0x8] sm:$0xff]
        %v271 = vld [vmem:[%s243] sm:$0xff]
        %v272 = vld [vmem:[%s243 + $0x8] sm:$0xff]
        %v273 = vsub.f32 %v271, %v269
        %v274 = vsub.f32 %v272, %v270
        %v275 = vmul.f32 %v273, %v273
        %v276 = vmul.f32 %v274, %v274
        %vm277 = vcmask 261120
        %v278 = vsel %vm277, %v275, 0.0
        %279 = vadd.xlane.f32.xlu0 %v278
        %v280 = vpop.xlane.xlu0 %279
        %v281 = vsel %vm277, %v276, 0.0
        %282 = vadd.xlane.f32.xlu0 %v281
        %v283 = vpop.xlane.xlu0 %282
        %v284 = vld [vmem:[%s257] sm:$0xff]
        %v285 = vld [vmem:[%s257 + $0x8] sm:$0xff]
        %v286 = vcvt.s32.f32 %v284
        %v287 = vcvt.s32.f32 %v285
        %v288 = vadd.f32 %v280, 1e-09
        %v289 = vadd.f32 %v283, 1e-09
        %v290 = vrsqrt.pop %v288
        %v291 = vmul.f32 %v288, %v290
        %vm292 = vcmp.eq.f32.partialorder %v288, inf
        %v293 = vsel %vm292, %v288, %v291
        %vm294 = vcmp.eq.f32.partialorder %v288, 0.0
        %v295 = vand.u32 %v288, 2147483648
        %v296 = vsel %vm294, %v295, %v293
        %v297 = vrsqrt.pop %v289
        %v298 = vmul.f32 %v289, %v297
        %vm299 = vcmp.eq.f32.partialorder %v289, inf
        %v300 = vsel %vm299, %v289, %v298
        %vm301 = vcmp.eq.f32.partialorder %v289, 0.0
        %v302 = vand.u32 %v289, 2147483648
        %v303 = vsel %vm301, %v302, %v300
        %v304 = vsub.f32 1.0, %v296
        %v305 = vsub.f32 1.0, %v303
        %v306 = vmax.f32 %v304, 0.0
        %v307 = vmax.f32 %v305, 0.0
        %v308 = vmul.f32 %v286, %v280
        %v309 = vmul.f32 %v287, %v283
        %v310 = vsub.f32 1.0, %v286
        %v311 = vsub.f32 1.0, %v287
        %v312 = vmul.f32 %v310, %v306
        %v313 = vmul.f32 %v311, %v307
        %v314 = vmul.f32 %v312, %v306
        %v315 = vmul.f32 %v313, %v307
        %v316 = vadd.f32 %v308, %v314
        %v317 = vadd.f32 %v309, %v315
        %v318 = vmul.f32 %v316, 0.5
        %v319 = vmul.f32 %v317, 0.5
        %v320 = vlaneseq
        %v321 = vshrl.u32 %v320, 7
        %v322 = vadd.s32 %v321, 8
        %s323 = smul.u32 %s15, 16
        %v324 = vstv %s323
        %v325 = vadd.s32 %v321, %v324
        %v326 = vadd.s32 %v322, %v324
        %vm327 = vcmp.lt.s32.totalorder %v325, 50
        %vm328 = vcmp.lt.s32.totalorder %v326, 50
        %v329 = vsel %vm327, %v318, 0.0
        %v330 = vsel %vm328, %v319, 0.0
        %s331 = sld [smem:[#allocation2]]
        %vm332 = vcmask 7168
        %v333 = vsel %vm332, %v329, 0.0
        %v334 = vsel %vm332, %v330, 0.0
        %v335 = vadd.f32 %v333, %v334
        %336 = vadd.xlane.f32.xlu0 %v335
        %v337 = vpop.xlane.xlu0 %336
        %v338 = vrot.slane %v337, 4
        %v339 = vadd.f32 %v337, %v338
        %v340 = vrot.slane %v339, 2
        %v341 = vadd.f32 %v339, %v340
        %v342 = vrot.slane %v341, 1
        %v343 = vadd.f32 %v341, %v342
        %s344 = vtos %v343
        %s345 = sadd.f32 %s331, %s344
        %s346 = scalar_lea.smem [#allocation2], 0
        %347 = sst [smem:[%s346]] %s345
        %p348 = scmp.eq.s32.totalorder %s15, 3
        // Predicated region
        $region37: #{tpu_custom_call.1} parent=31 // pred_check
          %p349 = pneg %p348
        $region38: #{tpu_custom_call.1} parent=31 // pred_check_branch
          %351 = sbr.rel (%p349) target = $region40
        $region39: #{tpu_custom_call.1} parent=31 // pred_region
          %s352 = sld [smem:[#allocation2]]
          %v353 = vrcp.pop 50.0
          %s354 = vtos %v353
          %s355 = smul.f32 %s352, %s354
          %356 = sst [smem:[%s346]] %s355
        $region40: #{tpu_custom_call.1} parent=31 // pred_fallthru
          _
        // Predicated region
        $region41: #{tpu_custom_call.1} parent=31 // pred_check
          %p357 = pneg %p106
        $region42: #{tpu_custom_call.1} parent=31 // pred_check_branch
          %359 = sbr.rel (%p357) target = $region44
        $region43: #{tpu_custom_call.1} parent=31 // pred_region
          %s361 = ssub.s32 16, 16
          %362 = vsyncadd [#allocation3], %s361
          %365 = dma.smem_to_hbm [#allocation2], 16, %s3, [#allocation3]
        $region44: #{tpu_custom_call.1} parent=31 // pred_fallthru
          _
        // Predicated region
        $region45: #{tpu_custom_call.1} parent=31 // pred_check
          %p366 = pneg %p106
        $region46: #{tpu_custom_call.1} parent=31 // pred_check_branch
          %368 = sbr.rel (%p366) target = $region48
        $region47: #{tpu_custom_call.1} parent=31 // pred_region
          %369 = dma.done [#allocation3], 16
        $region48: #{tpu_custom_call.1} parent=31 // pred_fallthru
          _
        %370 = sfence
      $region32: #{tpu_custom_call.1} parent=5 // pred_fallthru
        _
      %p371 = scmp.le.s32.totalorder 2, %s10
      // Predicated region
      $region49: #{tpu_custom_call.1} parent=5 // pred_check
        %p372 = pneg %p371
      $region50: #{tpu_custom_call.1} parent=5 // pred_check_branch
        %374 = sbr.rel (%p372) target = $region52
      $region51: #{tpu_custom_call.1} parent=5 // pred_region
        %s375 = ssub.s32 %s10, 2
      $region52: #{tpu_custom_call.1} parent=5 // pred_fallthru
        _
    $region6: #{tpu_custom_call.1} parent=1 // loop_footer
      %s14 = sadd.s32 1, %s10
    $region7: #{tpu_custom_call.1} parent=1 // loop_footer_branch
      %9 = sbr.rel target = $region3
    $region8: #{tpu_custom_call.1} parent=1 // loop_exit
      _
    %376 = vsyncpa [#allocation3], 1
    %s377 = scalar_lea.sflag [#allocation3], 1
    %378 = vsyncpa %s377, 1

</llo_original>
